<compile_context>
chip_gen: v6e
topology: v6e:2x2x1
jax: 0.10.0
libtpu: 0.0.40
codegen_flags: <defaults>
</compile_context>

<pallas_src>
import functools

import jax
import jax.numpy as jnp
from jax.experimental import pallas as pl
from jax.experimental.pallas import tpu as pltpu

_MB = 1024 * 1024
_SMALL_PROBLEM_ELEMS = 128 * 1024  # below this, plain XLA wins


def _round_up(x, m):
    return ((x + m - 1) // m) * m


def _tpu_generation():
    try:
        kind = jax.devices()[0].device_kind.lower()
    except Exception:
        kind = ""
    if "v7" in kind:
        return "v7x"
    if "v6" in kind:
        return "v6e"
    if "v5" in kind:
        return "v5e"
    return "unknown"


def _generation_params(gen):
    """Returns (block_budget_bytes, row_tile_cap, min_grid_steps, vmem_limit_cap)."""
    if gen == "v6e":
        # 128 MiB physical VMEM, ~1.4 TB/s HBM: big tiles amortize per-step cost.
        return 48 * _MB, 2048, 1, 100 * _MB
    if gen == "v7x":
        # 64 MiB VMEM per TC, 2 TCs/chip: smaller blocks and keep >= 2 grid
        # steps so the "parallel" frame axis can be sharded across both cores.
        return 24 * _MB, 1024, 2, 56 * _MB
    if gen == "v5e":
        # 16 MiB default scoped VMEM, ~820 GB/s HBM.
        return 12 * _MB, 512, 1, 100 * _MB
    # Unknown: conservative (v5e-safe).
    return 12 * _MB, 512, 1, 64 * _MB


def _vmem_footprint(tt, bs, F, L, in_itemsize, out_itemsize, sublane):
    """Padding-aware bytes for double-buffered blocks + resident weight/bias."""
    Fp = _round_up(F, 128)
    Lp = _round_up(L, 128)
    OLp = _round_up(bs * L, 128)
    ttp = _round_up(tt, sublane)
    x_blk = bs * ttp * Fp * in_itemsize
    o_blk = ttp * OLp * out_itemsize
    w_blk = _round_up(F, sublane) * Lp * in_itemsize
    b_blk = 8 * Lp * 4
    return 2 * (x_blk + o_blk + w_blk + b_blk)


def _choose_row_tile(T, bs, F, L, in_itemsize, out_itemsize, *,
                     budget, cap, min_steps, sublane):
    """Largest frame tile whose padded, double-buffered blocks fit the budget."""
    Fp = _round_up(F, 128)
    Lp = _round_up(L, 128)
    OLp = _round_up(bs * L, 128)
    fixed = 2 * (_round_up(F, sublane) * Lp * in_itemsize) + 2 * (8 * Lp * 4)
    avail = max(budget - fixed, 0)
    per_row = 2 * (bs * Fp * in_itemsize + OLp * out_itemsize)
    tt = max(avail // max(per_row, 1), sublane)
    tt = min(tt, cap, T)
    if min_steps > 1 and T > sublane * min_steps:
        # Keep at least `min_steps` grid steps (megacore sharding on v7x).
        tt = min(tt, _round_up(pl.cdiv(T, min_steps), sublane))
    if tt < T:
        tt = max(sublane, (tt // sublane) * sublane)  # keep block dims legal
    return int(tt)


def _input_process_kernel(x_ref, w_ref, b_ref, o_ref, *, per_batch_store):
    # x_ref: [bs, tt, F]  (tile of the ORIGINAL [bs, T, F] array)
    # w_ref: [F, L]       (pre-transposed once in the wrapper, resident)
    # b_ref: [1, L]       (f32, resident)
    # o_ref: [tt, bs*L]   (lane-dense view of the permuted output [T, bs, L])
    bs, tt, _ = x_ref.shape
    L = w_ref.shape[1]
    w = w_ref[...]
    # Bias broadcast hoisted out of the unrolled batch loop (no per-iter bcast).
    b = jnp.broadcast_to(b_ref[...].astype(jnp.float32), (tt, L))

    if per_batch_store:
        # L % 128 == 0: store each batch column directly at a lane-aligned
        # offset -> unmasked vst, no big concatenated f32 live value.
        for bi in range(bs):
            acc = jnp.dot(x_ref[bi], w, preferred_element_type=jnp.float32)
            o_ref[:, bi * L:(bi + 1) * L] = (acc + b).astype(o_ref.dtype)
    else:
        cols = []
        for bi in range(bs):
            acc = jnp.dot(x_ref[bi], w, preferred_element_type=jnp.float32)
            cols.append(acc + b)
        y = cols[0] if bs == 1 else jnp.concatenate(cols, axis=-1)  # [tt, bs*L]
        o_ref[...] = y.astype(o_ref.dtype)


@functools.partial(jax.jit,
                   static_argnames=("compute_dtype", "row_tile", "force_pallas"))
def input_process(x, weight, bias, *, compute_dtype=None, row_tile=None,
                  force_pallas=False):
    """x: [bs, T, F]; weight: [L, F] (torch layout); bias: [L] -> out [T, bs, L]."""
    bs, T, F = x.shape
    L = weight.shape[0]
    out_dtype = x.dtype

    # Small-problem fallback: fixed pallas_call/DMA setup overhead dominates.
    if not force_pallas and T * bs * max(F, L) < _SMALL_PROBLEM_ELEMS:
        y = jnp.einsum("btf,lf->tbl", x, weight) + bias
        return y.astype(out_dtype)

    cdt = jnp.dtype(compute_dtype) if compute_dtype is not None else jnp.dtype(x.dtype)
    in_itemsize = cdt.itemsize
    out_itemsize = jnp.dtype(out_dtype).itemsize
    sublane = 16 if in_itemsize == 2 else 8

    gen = _tpu_generation()
    budget, cap, min_steps, vmem_cap = _generation_params(gen)

    tt = row_tile if row_tile is not None else _choose_row_tile(
        T, bs, F, L, in_itemsize, out_itemsize,
        budget=budget, cap=cap, min_steps=min_steps, sublane=sublane)

    footprint = _vmem_footprint(tt, bs, F, L, in_itemsize, out_itemsize, sublane)
    vmem_limit = int(min(vmem_cap, max(footprint + 4 * _MB, 16 * _MB)))

    xm = x.astype(cdt)
    wt = weight.T.astype(cdt)                # one-time [F, L]: MXU-ready RHS
    b2 = bias.reshape(1, L).astype(jnp.float32)

    kernel = functools.partial(_input_process_kernel,
                               per_batch_store=(L % 128 == 0))

    out2d = pl.pallas_call(
        kernel,
        out_shape=jax.ShapeDtypeStruct((T, bs * L), out_dtype),
        grid_spec=pltpu.PrefetchScalarGridSpec(
            num_scalar_prefetch=0,
            grid=(pl.cdiv(T, tt),),
            in_specs=[
                pl.BlockSpec((bs, tt, F), lambda t: (0, t, 0)),  # x, no transpose
                pl.BlockSpec((F, L), lambda t: (0, 0)),          # weight, resident
                pl.BlockSpec((1, L), lambda t: (0, 0)),          # bias, resident
            ],
            out_specs=pl.BlockSpec((tt, bs * L), lambda t: (t, 0)),  # lane-dense
        ),
        compiler_params=pltpu.CompilerParams(
            dimension_semantics=("parallel",),
            vmem_limit_bytes=vmem_limit,
        ),
    )(xm, wt, b2)

    # [T, bs*L] -> [T, bs, L] is a free row-major metadata reshape.
    return out2d.reshape(T, bs, L)


if __name__ == "__main__":
    key = jax.random.PRNGKey(0)

    # --- Test 1: small shapes consistent with the module (exercise the
    #     lane-concat path; force the Pallas path past the small-size fallback).
    bs, T, F, L = 2, 8, 32, 64
    kx, kw, kb = jax.random.split(key, 3)
    x = jax.random.normal(kx, (bs, T, F), dtype=jnp.float32)
    weight = jax.random.normal(kw, (L, F), dtype=jnp.float32) * 0.02
    bias = jax.random.normal(kb, (L,), dtype=jnp.float32) * 0.01

    out = jax.block_until_ready(input_process(x, weight, bias, force_pallas=True))
    ref = jnp.einsum("btf,lf->tbl", x, weight) + bias
    assert out.shape == (T, bs, L)
    assert jnp.allclose(out, ref, atol=1e-5, rtol=1e-5)

    # --- Test 2: larger shapes exercising frame tiling, the L%128==0 direct
    #     per-batch store path, and the bf16 bandwidth-bound compute path.
    bs2, T2, F2, L2 = 2, 512, 256, 256
    kx2, kw2, kb2 = jax.random.split(jax.random.PRNGKey(1), 3)
    x2 = jax.random.normal(kx2, (bs2, T2, F2), dtype=jnp.float32)
    weight2 = jax.random.normal(kw2, (L2, F2), dtype=jnp.float32) * 0.02
    bias2 = jax.random.normal(kb2, (L2,), dtype=jnp.float32) * 0.01

    out2 = jax.block_until_ready(
        input_process(x2, weight2, bias2, compute_dtype="bfloat16"))
    ref2 = jnp.einsum("btf,lf->tbl", x2, weight2,
                      precision=jax.lax.Precision.HIGHEST) + bias2
    assert out2.shape == (T2, bs2, L2)
    assert jnp.allclose(out2, ref2, atol=3e-2, rtol=3e-2)

    print("KERNEL_OK")
</pallas_src>

<mosaic_0001>
module attributes {stable_mosaic.version = 11 : i64} {
  func.func @_input_process_kernel(%arg0: i32, %arg1: memref<2x8x32xf32, #tpu.memory_space<vmem>>, %arg2: memref<32x64xf32, #tpu.memory_space<vmem>>, %arg3: memref<1x64xf32, #tpu.memory_space<vmem>>, %arg4: memref<8x128xf32, #tpu.memory_space<vmem>>) attributes {dimension_semantics = [#tpu.dimension_semantics<parallel>], iteration_bounds = array<i64: 1>, scalar_prefetch = 0 : i64, scratch_operands = 0 : i64, tpu.core_type = #tpu.core_type<tc>, window_params = [{transform_indices = @transform_0, window_bounds = array<i64: 2, 8, 32>}, {pipeline_mode = #tpu.pipeline_mode<synchronous>, transform_indices = @transform_1, window_bounds = array<i64: 32, 64>}, {pipeline_mode = #tpu.pipeline_mode<synchronous>, transform_indices = @transform_2, window_bounds = array<i64: 1, 64>}, {transform_indices = @transform_3, window_bounds = array<i64: 8, 128>}]} {
    %c0 = arith.constant 0 : index
    %c0_0 = arith.constant 0 : index
    %0 = vector.load %arg2[%c0, %c0_0] : memref<32x64xf32, #tpu.memory_space<vmem>>, vector<32x64xf32>
    %c0_1 = arith.constant 0 : index
    %c0_2 = arith.constant 0 : index
    %1 = vector.load %arg3[%c0_1, %c0_2] : memref<1x64xf32, #tpu.memory_space<vmem>>, vector<1x64xf32>
    %2 = vector.shape_cast %1 : vector<1x64xf32> to vector<1x64xf32>
    %3 = vector.broadcast %2 : vector<1x64xf32> to vector<8x64xf32>
    %c0_3 = arith.constant 0 : index
    %c0_4 = arith.constant 0 : index
    %c0_5 = arith.constant 0 : index
    %4 = vector.load %arg1[%c0_3, %c0_4, %c0_5] : memref<2x8x32xf32, #tpu.memory_space<vmem>>, vector<1x8x32xf32>
    %5 = vector.shape_cast %4 : vector<1x8x32xf32> to vector<8x32xf32>
    %cst = arith.constant dense<0.000000e+00> : vector<8x64xf32>
    %6 = tpu.matmul %5, %0, %cst {dimension_numbers = #tpu.dot_dimension_numbers<[1], [0], [0], [1], [0, 0, 1, 1], [], []>} : vector<8x32xf32>, vector<32x64xf32>, vector<8x64xf32> -> vector<8x64xf32>
    %7 = arith.addf %6, %3 : vector<8x64xf32>
    %c1 = arith.constant 1 : index
    %c0_6 = arith.constant 0 : index
    %c0_7 = arith.constant 0 : index
    %8 = vector.load %arg1[%c1, %c0_6, %c0_7] : memref<2x8x32xf32, #tpu.memory_space<vmem>>, vector<1x8x32xf32>
    %9 = vector.shape_cast %8 : vector<1x8x32xf32> to vector<8x32xf32>
    %cst_8 = arith.constant dense<0.000000e+00> : vector<8x64xf32>
    %10 = tpu.matmul %9, %0, %cst_8 {dimension_numbers = #tpu.dot_dimension_numbers<[1], [0], [0], [1], [0, 0, 1, 1], [], []>} : vector<8x32xf32>, vector<32x64xf32>, vector<8x64xf32> -> vector<8x64xf32>
    %11 = arith.addf %10, %3 : vector<8x64xf32>
    %12 = tpu.concatenate %7, %11 in 1 : vector<8x64xf32>, vector<8x64xf32> -> vector<8x128xf32>
    %c0_9 = arith.constant 0 : index
    %c0_10 = arith.constant 0 : index
    %13 = vector.load %arg4[%c0_9, %c0_10] : memref<8x128xf32, #tpu.memory_space<vmem>>, vector<8x128xf32>
    tpu.vector_store %arg4[%c0_9, %c0_10], %12 {strides = array<i32>} : memref<8x128xf32, #tpu.memory_space<vmem>>, vector<8x128xf32>,
    return
  }
  func.func @transform_0(%arg0: i32) -> (i32, i32, i32) {
    %c0_i32 = arith.constant 0 : i32
    %c0_i32_0 = arith.constant 0 : i32
    %c0_i32_1 = arith.constant 0 : i32
    return %c0_i32, %arg0, %c0_i32_0 : i32, i32, i32
  }
  func.func @transform_1(%arg0: i32) -> (i32, i32) {
    %c0_i32 = arith.constant 0 : i32
    %c0_i32_0 = arith.constant 0 : i32
    %c0_i32_1 = arith.constant 0 : i32
    return %c0_i32, %c0_i32_0 : i32, i32
  }
  func.func @transform_2(%arg0: i32) -> (i32, i32) {
    %c0_i32 = arith.constant 0 : i32
    %c0_i32_0 = arith.constant 0 : i32
    %c0_i32_1 = arith.constant 0 : i32
    return %c0_i32, %c0_i32_0 : i32, i32
  }
  func.func @transform_3(%arg0: i32) -> (i32, i32) {
    %c0_i32 = arith.constant 0 : i32
    %c0_i32_0 = arith.constant 0 : i32
    return %arg0, %c0_i32 : i32, i32
  }
}

</mosaic_0001>

<llo_original>
// kernel: input_process.1
$region0: #{input_process.1}
  #allocation0 [shape = 'u32[]', space=smem, size = 0x4, offset = 0x4, fixed_abs, tag = 'smem constant byte address 0x4 - core index']
  #allocation1 [shape = 'u32[144,128]{1,0:T(1,128)}', space=vmem, size = 0x12000, scoped, tag = 'internal scratch']
  %s0 = inlined_call_operand.hbm [shape: f32[2,8,32], index: 0, kind: input, shape index: {}]
  %s1 = inlined_call_operand.hbm [shape: f32[32,64], index: 1, kind: input, shape index: {}]
  %s2 = inlined_call_operand.vmem [shape: f32[1,64], index: 2, kind: input, shape index: {}]
  %s3 = inlined_call_operand.vmem [shape: f32[8,128], index: 3, kind: output, shape index: {}]
  %s4 = sld [smem:[#allocation0]]
  $region30: #{input_process.1} parent=0
    _
  %s6 = ssub.s32 1, %s4
  %s7 = scalar_select 0, %s6, %s4
  $region1: #{input_process.1} parent=0
    #allocation2 [shape = 'u8[8192]{0}', space=vmem, size = 0x2000, scoped, tag = 'input window, operand 0, single buffered']
    #allocation3 [shape = 's32[1]{0}', space=sflag, size = 0x4, scoped, tag = 'scoped memory for input_process.1']
    #allocation4 [shape = 'u8[16384]{0}', space=vmem, size = 0x4000, scoped, tag = 'input window, operand 1, single buffered']
    #allocation5 [shape = 's32[1]{0}', space=sflag, size = 0x4, scoped, tag = 'scoped memory for input_process.1']
    %8 = vsyncpa [#allocation3], 0
    %9 = vsyncpa [#allocation5], 0
    // Predicated region
    $region2: #{input_process.1} parent=1 // pred_check
      _
    $region3: #{input_process.1} parent=1 // pred_check_branch
      %11 = sbr.rel (0) target = $region5
    $region4: #{input_process.1} parent=1 // pred_region
      %s13 = ssub.s32 256, 256
      %14 = vsyncadd [#allocation3], %s13
      %s15 = sshll.u32 [#allocation2], 4
      %s16 = int_to_ptr.vmem [resolvable:$true] %s15
      %21 = dma.hbm_to_vmem [thread:$0]  %s0, 256, %s16, [#allocation3], 128, 128, 8
    $region5: #{input_process.1} parent=1 // pred_fallthru
      _
    // Predicated region
    $region6: #{input_process.1} parent=1 // pred_check
      _
    $region7: #{input_process.1} parent=1 // pred_check_branch
      %23 = sbr.rel (0) target = $region9
    $region8: #{input_process.1} parent=1 // pred_region
      %s25 = ssub.s32 512, 512
      %26 = vsyncadd [#allocation5], %s25
      %s27 = sshll.u32 [#allocation4], 4
      %s28 = int_to_ptr.vmem [resolvable:$true] %s27
      %33 = dma.hbm_to_vmem [thread:$0]  %s1, 512, %s28, [#allocation5], 128, 128, 8
    $region9: #{input_process.1} parent=1 // pred_fallthru
      _
    // Predicated region
    $region10: #{input_process.1} parent=1 // pred_check
      _
    $region11: #{input_process.1} parent=1 // pred_check_branch
      %35 = sbr.rel (0) target = $region13
    $region12: #{input_process.1} parent=1 // pred_region
      _
    $region13: #{input_process.1} parent=1 // pred_fallthru
      _
    // Predicated region
    $region14: #{input_process.1} parent=1 // pred_check
      _
    $region15: #{input_process.1} parent=1 // pred_check_branch
      %37 = sbr.rel (0) target = $region17
    $region16: #{input_process.1} parent=1 // pred_region
      %38 = dma.done [#allocation3], 256
    $region17: #{input_process.1} parent=1 // pred_fallthru
      _
    // Predicated region
    $region18: #{input_process.1} parent=1 // pred_check
      _
    $region19: #{input_process.1} parent=1 // pred_check_branch
      %40 = sbr.rel (0) target = $region21
    $region20: #{input_process.1} parent=1 // pred_region
      %41 = dma.done [#allocation5], 512
    $region21: #{input_process.1} parent=1 // pred_fallthru
      _
    %v42 = vld [vmem:[#allocation4] sm:$0xff]
    %v43 = vld [vmem:[#allocation4 + $0x8] sm:$0xff]
    %v44 = vld [vmem:[#allocation4 + $0x10] sm:$0xff]
    %v45 = vld [vmem:[#allocation4 + $0x18] sm:$0xff]
    %v46 = vld [vmem:[%s2] sm:$0x1]
    %v48 = vlaneseq
    %v49 = vshrl.u32 %v48, 7
    %v50 = vsub.s32 0, %v49
    %v51 = vrot.slane %v46, %v50
    %v53 = vld [vmem:[#allocation2] sm:$0xff]
    %vm54 = vcmask 261120
    %v56 = vsel %vm54, %v53, 0
    %58 = vmatprep.subr.mxu0 0.0
    %59 = vmatpush1.msra.mxu0 0.0
    %60 = vmatprep.subr.mxu0 0.0
    %61 = vmatpush1.msra.mxu0 0.0
    %62 = vmatprep.subr.mxu0 0.0
    %63 = vmatpush1.msra.mxu0 0.0
    %64 = vmatprep.subr.mxu0 0.0
    %65 = vmatpush1.msra.mxu0 0.0
    %66 = vmatprep.subr.mxu0 0.0
    %67 = vmatpush1.msra.mxu0 0.0
    %68 = vmatprep.subr.mxu0 0.0
    %69 = vmatpush1.msra.mxu0 0.0
    %70 = vmatprep.subr.mxu0 0.0
    %71 = vmatpush1.msra.mxu0 0.0
    %72 = vmatprep.subr.mxu0 0.0
    %73 = vmatpush1.msra.mxu0 0.0
    %74 = vmatprep.subr.mxu0 0.0
    %75 = vmatpush1.msra.mxu0 0.0
    %76 = vmatprep.subr.mxu0 0.0
    %77 = vmatpush1.msra.mxu0 0.0
    %78 = vmatprep.subr.mxu0 0.0
    %79 = vmatpush1.msra.mxu0 0.0
    %80 = vmatprep.subr.mxu0 0.0
    %81 = vmatpush1.msra.mxu0 0.0
    %82 = vmatprep.subr.mxu0 0.0
    %83 = vmatpush1.msra.mxu0 %v45
    %84 = vmatprep.subr.mxu0 0.0
    %85 = vmatpush1.msra.mxu0 %v44
    %86 = vmatprep.subr.mxu0 0.0
    %87 = vmatpush1.msra.mxu0 %v43
    %88 = vmatprep.subr.mxu0 0.0
    %89 = vmatpush1.msra.mxu0 %v42
    %90 = vmatprep.subr.mxu0 0.0
    %91 = vmatpush2.msra.mxu0 0.0
    %92 = vmatprep.subr.mxu0 0.0
    %93 = vmatpush2.msra.mxu0 0.0
    %94 = vmatprep.subr.mxu0 0.0
    %95 = vmatpush2.msra.mxu0 0.0
    %96 = vmatprep.subr.mxu0 0.0
    %97 = vmatpush2.msra.mxu0 0.0
    %98 = vmatprep.subr.mxu0 0.0
    %99 = vmatpush2.msra.mxu0 0.0
    %100 = vmatprep.subr.mxu0 0.0
    %101 = vmatpush2.msra.mxu0 0.0
    %102 = vmatprep.subr.mxu0 0.0
    %103 = vmatpush2.msra.mxu0 0.0
    %104 = vmatprep.subr.mxu0 0.0
    %105 = vmatpush2.msra.mxu0 0.0
    %106 = vmatprep.subr.mxu0 0.0
    %107 = vmatpush2.msra.mxu0 0.0
    %108 = vmatprep.subr.mxu0 0.0
    %109 = vmatpush2.msra.mxu0 0.0
    %110 = vmatprep.subr.mxu0 0.0
    %111 = vmatpush2.msra.mxu0 0.0
    %112 = vmatprep.subr.mxu0 0.0
    %113 = vmatpush2.msra.mxu0 0.0
    %114 = vmatprep.subr.mxu0 0.0
    %115 = vmatpush2.msra.mxu0 0.0
    %116 = vmatprep.subr.mxu0 0.0
    %117 = vmatpush2.msra.mxu0 0.0
    %118 = vmatprep.subr.mxu0 0.0
    %119 = vmatpush2.msra.mxu0 0.0
    %120 = vmatprep.subr.mxu0 0.0
    %121 = vmatpush2.msra.mxu0 0.0
    %122 = vmatprep.mubr.f32.mxu0 0.0
    %123 = vmatmul.mubr.f32.gmra.mxu0 %v56
    %v124 = vpop.f32.mrf.mxu0
    %v125 = vadd.f32 %v51, %v124
    %v126 = vpop.f32.mrf.mxu0
    %127 = vdwg.mxu0
    %s128 = scalar_lea.vmem [#allocation2], 8
    %v129 = vld [vmem:[%s128] sm:$0xff]
    %v131 = vsel %vm54, %v129, 0
    %133 = vmatprep.subr.mxu0 0.0
    %134 = vmatpush1.msra.mxu0 0.0
    %135 = vmatprep.subr.mxu0 0.0
    %136 = vmatpush1.msra.mxu0 0.0
    %137 = vmatprep.subr.mxu0 0.0
    %138 = vmatpush1.msra.mxu0 0.0
    %139 = vmatprep.subr.mxu0 0.0
    %140 = vmatpush1.msra.mxu0 0.0
    %141 = vmatprep.subr.mxu0 0.0
    %142 = vmatpush1.msra.mxu0 0.0
    %143 = vmatprep.subr.mxu0 0.0
    %144 = vmatpush1.msra.mxu0 0.0
    %145 = vmatprep.subr.mxu0 0.0
    %146 = vmatpush1.msra.mxu0 0.0
    %147 = vmatprep.subr.mxu0 0.0
    %148 = vmatpush1.msra.mxu0 0.0
    %149 = vmatprep.subr.mxu0 0.0
    %150 = vmatpush1.msra.mxu0 0.0
    %151 = vmatprep.subr.mxu0 0.0
    %152 = vmatpush1.msra.mxu0 0.0
    %153 = vmatprep.subr.mxu0 0.0
    %154 = vmatpush1.msra.mxu0 0.0
    %155 = vmatprep.subr.mxu0 0.0
    %156 = vmatpush1.msra.mxu0 0.0
    %157 = vmatprep.subr.mxu0 0.0
    %158 = vmatpush1.msra.mxu0 %v45
    %159 = vmatprep.subr.mxu0 0.0
    %160 = vmatpush1.msra.mxu0 %v44
    %161 = vmatprep.subr.mxu0 0.0
    %162 = vmatpush1.msra.mxu0 %v43
    %163 = vmatprep.subr.mxu0 0.0
    %164 = vmatpush1.msra.mxu0 %v42
    %165 = vmatprep.subr.mxu0 0.0
    %166 = vmatpush2.msra.mxu0 0.0
    %167 = vmatprep.subr.mxu0 0.0
    %168 = vmatpush2.msra.mxu0 0.0
    %169 = vmatprep.subr.mxu0 0.0
    %170 = vmatpush2.msra.mxu0 0.0
    %171 = vmatprep.subr.mxu0 0.0
    %172 = vmatpush2.msra.mxu0 0.0
    %173 = vmatprep.subr.mxu0 0.0
    %174 = vmatpush2.msra.mxu0 0.0
    %175 = vmatprep.subr.mxu0 0.0
    %176 = vmatpush2.msra.mxu0 0.0
    %177 = vmatprep.subr.mxu0 0.0
    %178 = vmatpush2.msra.mxu0 0.0
    %179 = vmatprep.subr.mxu0 0.0
    %180 = vmatpush2.msra.mxu0 0.0
    %181 = vmatprep.subr.mxu0 0.0
    %182 = vmatpush2.msra.mxu0 0.0
    %183 = vmatprep.subr.mxu0 0.0
    %184 = vmatpush2.msra.mxu0 0.0
    %185 = vmatprep.subr.mxu0 0.0
    %186 = vmatpush2.msra.mxu0 0.0
    %187 = vmatprep.subr.mxu0 0.0
    %188 = vmatpush2.msra.mxu0 0.0
    %189 = vmatprep.subr.mxu0 0.0
    %190 = vmatpush2.msra.mxu0 0.0
    %191 = vmatprep.subr.mxu0 0.0
    %192 = vmatpush2.msra.mxu0 0.0
    %193 = vmatprep.subr.mxu0 0.0
    %194 = vmatpush2.msra.mxu0 0.0
    %195 = vmatprep.subr.mxu0 0.0
    %196 = vmatpush2.msra.mxu0 0.0
    %197 = vmatprep.mubr.f32.mxu0 0.0
    %198 = vmatmul.mubr.f32.gmra.mxu0 %v131
    %v199 = vpop.f32.mrf.mxu0
    %v200 = vadd.f32 %v51, %v199
    %v201 = vpop.f32.mrf.mxu0
    %202 = vdwg.mxu0
    %204 = vrot.lane.b32.xlu0 %v200, 64
    %v205 = vpop.permute.xlu0 %204
    %vm207 = vcmask 523264
    %v208 = vsel %vm207, %v125, %v205
    %209 = vst [vmem:[%s3] sm:$0xff] %v208
    // Predicated region
    $region22: #{input_process.1} parent=1 // pred_check
      _
    $region23: #{input_process.1} parent=1 // pred_check_branch
      %211 = sbr.rel (0) target = $region25
    $region24: #{input_process.1} parent=1 // pred_region
      _
    $region25: #{input_process.1} parent=1 // pred_fallthru
      _
    // Predicated region
    $region26: #{input_process.1} parent=1 // pred_check
      _
    $region27: #{input_process.1} parent=1 // pred_check_branch
      %213 = sbr.rel (0) target = $region29
    $region28: #{input_process.1} parent=1 // pred_region
      _
    $region29: #{input_process.1} parent=1 // pred_fallthru
      _
    %214 = vsyncpa [#allocation3], 1
    %215 = vsyncpa [#allocation5], 1

</llo_original>
